<compile_context>
chip_gen: v5e
topology: v5e:2x2
jax: 0.10.0
libtpu: 0.0.40
codegen_flags: <defaults>
</compile_context>

<pallas_src>
import jax
import jax.numpy as jnp
from jax.experimental import pallas as pl
from jax.experimental.pallas import tpu as pltpu


def _cdiv(a, b):
    return (a + b - 1) // b


def _round_up(n, m):
    return _cdiv(n, m) * m


def _vmem_limits():
    """Per-generation (vmem_limit_bytes, tiling working-set budget).

    v5e / v6e : 128 MiB physical VMEM -> limit 96 MiB, budget 88 MiB
    v7x       :  64 MiB per core      -> limit 48 MiB, budget 40 MiB
    """
    try:
        info = pltpu.get_tpu_info()
        cap = int(getattr(info, "vmem_capacity_bytes", 0)) or (64 << 20)
    except Exception:
        cap = 64 << 20  # assume the smallest (v7x per-core VMEM)
    limit = max(32 << 20, min(cap * 3 // 4, 96 << 20))
    budget = max(16 << 20, limit - (8 << 20))
    return limit, budget


# ---------------------------------------------------------------------------
# Kernels
# ---------------------------------------------------------------------------
def _linear_bias_kernel(x_ref, w_ref, b_ref, o_ref):
    # BN already folded into (w, b) at parameter-prepare time -> MXU-only hot
    # loop. x arrives f32 from HBM and is cast on-chip (no wrapper pass).
    x = x_ref[...].astype(w_ref.dtype)
    acc = jnp.dot(x, w_ref[...], preferred_element_type=jnp.float32)
    o_ref[...] = (acc + b_ref[...]).astype(o_ref.dtype)


def _affine_kernel(x_ref, scale_ref, shift_ref, o_ref):
    # BatchNorm1d (inference) as a per-channel affine: pure streaming.
    o_ref[...] = x_ref[...] * scale_ref[...] + shift_ref[...]


# ---------------------------------------------------------------------------
# One-time parameter preparation (hoisted out of the per-call path)
# ---------------------------------------------------------------------------
def prepare_eval_params(params, eps=1e-5, weight_dtype=jnp.bfloat16):
    """Fold BN into per-channel (scale, shift) and into the classifier:

        logits = x @ (diag(scale) W^T) + shift @ W^T

    The folded weight is transposed to (C, N), zero-padded to a lane-dense
    multiple of 128 classes and cast to bf16 once, here, not per call.
    """
    gamma, beta, run_mean, run_var, cls_w = params
    inv_std = 1.0 / jnp.sqrt(run_var.astype(jnp.float32) + eps)
    scale = gamma.astype(jnp.float32) * inv_std
    shift = beta.astype(jnp.float32) - run_mean.astype(jnp.float32) * scale

    num_classes, c = cls_w.shape
    w_folded = scale[:, None] * cls_w.T.astype(jnp.float32)        # (C, N)
    bias = shift[None, :] @ cls_w.T.astype(jnp.float32)            # (1, N)

    n_pad = _round_up(num_classes, 128)
    w_padded = jnp.pad(w_folded, ((0, 0), (0, n_pad - num_classes)))
    w_padded = w_padded.astype(weight_dtype)
    bias_padded = jnp.pad(bias, ((0, 0), (0, n_pad - num_classes)))
    bias_padded = bias_padded.astype(jnp.float32)

    return {
        "scale_2d": scale.reshape(1, -1),
        "shift_2d": shift.reshape(1, -1),
        "w_padded": w_padded,
        "bias_padded": bias_padded,
        "num_classes": num_classes,
    }


# ---------------------------------------------------------------------------
# pallas_call wrappers
# ---------------------------------------------------------------------------
def _fused_bn_classifier(x_f32, w_padded, bias_padded, num_classes,
                         out_dtype=jnp.float32):
    """logits = x @ w_padded + bias_padded, sliced back to num_classes cols."""
    b_rows, c = x_f32.shape
    c_w, n_pad = w_padded.shape
    assert c_w == c and n_pad % 128 == 0
    limit, budget = _vmem_limits()
    xb = jnp.dtype(x_f32.dtype).itemsize
    wb = jnp.dtype(w_padded.dtype).itemsize
    ob = jnp.dtype(out_dtype).itemsize

    def _row_tiles(cap):
        cap = max(8, min(cap, _round_up(b_rows, 8)))
        n = _cdiv(b_rows, cap)
        tb_ = _round_up(_cdiv(b_rows, n), 8)
        return tb_, _cdiv(b_rows, tb_)

    tb, n_rows = _row_tiles(512)

    resident_ws = (2 * tb * c * xb + 2 * c * n_pad * wb + 2 * n_pad * 4
                   + 2 * tb * n_pad * ob)
    if resident_ws <= budget:
        # Whole folded weight stays VMEM-resident: its block index is
        # constant across the grid, so it is DMA'd from HBM exactly once.
        if n_rows == 1 and b_rows >= 16:
            # Give v7x's second TensorCore something to do.
            tb, n_rows = _row_tiles(_round_up(_cdiv(b_rows, 2), 8))
        grid = (n_rows,)
        in_specs = [
            pl.BlockSpec((tb, c), lambda i: (i, 0)),
            pl.BlockSpec((c, n_pad), lambda i: (0, 0)),   # loaded once
            pl.BlockSpec((1, n_pad), lambda i: (0, 0)),
        ]
        out_specs = pl.BlockSpec((tb, n_pad), lambda i: (i, 0))
        dim_sem = ("parallel",)
        bytes_accessed = (b_rows * c * xb + c * n_pad * wb + n_pad * 4
                          + b_rows * n_pad * ob)
    else:
        # Tile N on the OUTER grid axis so each weight tile is streamed
        # exactly once; the (smaller) x tiles are what get re-read.
        n_cols = _cdiv(n_pad, 512)
        tn = _round_up(_cdiv(n_pad, n_cols), 128)

        def _ws(tb_, tn_):
            return (2 * tb_ * c * xb + 2 * c * tn_ * wb + 2 * tn_ * 4
                    + 2 * tb_ * tn_ * ob)

        while tn > 128 and _ws(tb, tn) > budget:        # shrink tn first
            tn = max(128, _round_up(tn // 2, 128))
        while tb > 128 and _ws(tb, tn) > budget:        # then tb, floor 128
            tb = max(128, _round_up(tb // 2, 8))
        while tb > 8 and _ws(tb, tn) > budget:          # last resort
            tb = max(8, _round_up(tb // 2, 8))
        n_rows = _cdiv(b_rows, tb)
        n_cols = _cdiv(n_pad, tn)
        grid = (n_cols, n_rows)                         # j outer, i inner
        in_specs = [
            pl.BlockSpec((tb, c), lambda j, i: (i, 0)),
            pl.BlockSpec((c, tn), lambda j, i: (0, j)),  # constant per j
            pl.BlockSpec((1, tn), lambda j, i: (0, j)),
        ]
        out_specs = pl.BlockSpec((tb, tn), lambda j, i: (i, j))
        dim_sem = ("parallel", "parallel")
        bytes_accessed = (n_cols * b_rows * c * xb + c * n_pad * wb
                          + n_pad * 4 + b_rows * n_pad * ob)

    cost = pl.CostEstimate(flops=2 * b_rows * c * n_pad, transcendentals=0,
                           bytes_accessed=int(bytes_accessed))

    out = pl.pallas_call(
        _linear_bias_kernel,
        out_shape=jax.ShapeDtypeStruct((b_rows, n_pad), out_dtype),
        grid_spec=pltpu.PrefetchScalarGridSpec(
            num_scalar_prefetch=0,
            grid=grid,
            in_specs=in_specs,
            out_specs=out_specs,
        ),
        compiler_params=pltpu.CompilerParams(
            dimension_semantics=dim_sem,
            vmem_limit_bytes=limit,
        ),
        cost_estimate=cost,
    )(x_f32, w_padded, bias_padded)
    return out[:, :num_classes]


def _bn_inference(x_f32, scale_2d, shift_2d):
    """x:(B, C) f32 -> BatchNorm1d(inference)(x), f32 (matches PyTorch)."""
    b_rows, c = x_f32.shape
    limit, budget = _vmem_limits()

    # Double-buffered x + double-buffered out (f32) dominate the working set.
    max_tb = max(8, min(4096, (budget // (16 * c)) // 8 * 8))
    n = _cdiv(b_rows, max_tb)
    tb = _round_up(_cdiv(b_rows, n), 8)
    n_rows = _cdiv(b_rows, tb)
    if n_rows == 1 and b_rows >= 16:
        tb = _round_up(_cdiv(b_rows, 2), 8)
        n_rows = _cdiv(b_rows, tb)

    cost = pl.CostEstimate(flops=2 * b_rows * c, transcendentals=0,
                           bytes_accessed=2 * b_rows * c * 4 + 2 * c * 4)

    out = pl.pallas_call(
        _affine_kernel,
        out_shape=jax.ShapeDtypeStruct((b_rows, c), jnp.float32),
        grid_spec=pltpu.PrefetchScalarGridSpec(
            num_scalar_prefetch=0,
            grid=(n_rows,),
            in_specs=[
                pl.BlockSpec((tb, c), lambda i: (i, 0)),
                pl.BlockSpec((1, c), lambda i: (0, 0)),
                pl.BlockSpec((1, c), lambda i: (0, 0)),
            ],
            out_specs=pl.BlockSpec((tb, c), lambda i: (i, 0)),
        ),
        compiler_params=pltpu.CompilerParams(
            dimension_semantics=("parallel",),
            vmem_limit_bytes=limit,
        ),
        cost_estimate=cost,
    )(x_f32, scale_2d, shift_2d)
    return out


# ---------------------------------------------------------------------------
# Baseline eval-mode forward (glue in plain JAX, compute in Pallas)
# ---------------------------------------------------------------------------
def baseline_eval_forward(feats, cam_ids, prepared, base_dim):
    # sub = (cam_ids == 3) + (cam_ids == 6) -- only consumed by the training
    # branch (train_forward); computed here for fidelity with the original.
    _sub = (cam_ids == 3) | (cam_ids == 6)

    if feats.shape[0] == base_dim:
        # feats = bn_neck(feats.permute(1, 0)); logits = classifier(feats)
        x = feats.T.astype(jnp.float32)            # O(B*C) only; tiny
        return _fused_bn_classifier(x, prepared["w_padded"],
                                    prepared["bias_padded"],
                                    prepared["num_classes"])
    # feats = bn_neck(feats); return feats
    return _bn_inference(feats.astype(jnp.float32),
                         prepared["scale_2d"], prepared["shift_2d"])


def _reference(feats, params, base_dim, eps=1e-5):
    gamma, beta, run_mean, run_var, cls_w = params
    scale = gamma / jnp.sqrt(run_var + eps)
    if feats.shape[0] == base_dim:
        x = feats.T
        bn = (x - run_mean) * scale + beta
        return bn @ cls_w.T
    bn = (feats - run_mean) * scale + beta
    return bn


# ---------------------------------------------------------------------------
# main
# ---------------------------------------------------------------------------
if __name__ == "__main__":
    # Small, module-consistent shapes: base_dim=32, num_classes=16, batch=8.
    B, BASE_DIM, NUM_CLASSES = 8, 32, 16

    key = jax.random.PRNGKey(0)
    k1, k2, k3, k4, k5, k6, k7 = jax.random.split(key, 7)

    # "Backbone" shared feature sh_pl (backbone itself not provided).
    feats = jax.random.normal(k1, (B, BASE_DIM), jnp.float32)
    # Transposed-input case exercised by the first eval branch.
    feats_t = jax.random.normal(k6, (BASE_DIM, B), jnp.float32)
    cam_ids = jax.random.randint(k7, (B,), 1, 7)

    # Parameters (shapes per Baseline.__init__; values deterministic).
    gamma = 1.0 + 0.1 * jax.random.normal(k2, (BASE_DIM,), jnp.float32)
    beta = jnp.zeros((BASE_DIM,), jnp.float32)        # bias init to 0, frozen
    run_mean = 0.1 * jax.random.normal(k3, (BASE_DIM,), jnp.float32)
    run_var = jnp.abs(jax.random.normal(k4, (BASE_DIM,), jnp.float32)) + 0.5
    cls_w = jax.random.normal(k5, (NUM_CLASSES, BASE_DIM), jnp.float32) / jnp.sqrt(BASE_DIM)

    params = (gamma, beta, run_mean, run_var, cls_w)

    # One-time parameter prep (BN fold, weight fold/pad/cast) -- per review,
    # hoisted out of the per-call forward path.
    prepared = prepare_eval_params(params)
    prepared = jax.tree_util.tree_map(
        lambda x: jax.block_until_ready(x) if isinstance(x, jax.Array) else x,
        prepared)

    # Branch 1: feats.shape[0] != base_dim -> bn_neck(feats) returned (f32).
    out_feats = baseline_eval_forward(feats, cam_ids, prepared, BASE_DIM)
    out_feats = jax.block_until_ready(out_feats)
    ref_feats = _reference(feats, params, BASE_DIM)
    assert out_feats.shape == (B, BASE_DIM)
    assert jnp.allclose(out_feats, ref_feats, atol=1e-5, rtol=1e-5)

    # Branch 2: feats.shape[0] == base_dim -> permute + bn_neck + classifier.
    # Kernel uses a bf16 folded weight (f32 accumulation) -> bf16-level
    # tolerance against the f32 reference.
    logits = baseline_eval_forward(feats_t, cam_ids, prepared, BASE_DIM)
    logits = jax.block_until_ready(logits)
    ref_logits = _reference(feats_t, params, BASE_DIM)
    assert logits.shape == (B, NUM_CLASSES)
    assert jnp.allclose(logits, ref_logits, atol=5e-2, rtol=5e-2)

    print("KERNEL_OK")
</pallas_src>

<mosaic_0001>
module attributes {stable_mosaic.version = 11 : i64} {
  func.func @_affine_kernel(%arg0: i32, %arg1: memref<8x32xf32, #tpu.memory_space<vmem>>, %arg2: memref<1x32xf32, #tpu.memory_space<vmem>>, %arg3: memref<1x32xf32, #tpu.memory_space<vmem>>, %arg4: memref<8x32xf32, #tpu.memory_space<vmem>>) attributes {dimension_semantics = [#tpu.dimension_semantics<parallel>], iteration_bounds = array<i64: 1>, scalar_prefetch = 0 : i64, scratch_operands = 0 : i64, tpu.core_type = #tpu.core_type<tc>, window_params = [{transform_indices = @transform_0, window_bounds = array<i64: 8, 32>}, {pipeline_mode = #tpu.pipeline_mode<synchronous>, transform_indices = @transform_1, window_bounds = array<i64: 1, 32>}, {pipeline_mode = #tpu.pipeline_mode<synchronous>, transform_indices = @transform_2, window_bounds = array<i64: 1, 32>}, {transform_indices = @transform_3, window_bounds = array<i64: 8, 32>}]} {
    %c0 = arith.constant 0 : index
    %c0_0 = arith.constant 0 : index
    %0 = vector.load %arg1[%c0, %c0_0] : memref<8x32xf32, #tpu.memory_space<vmem>>, vector<8x32xf32>
    %c0_1 = arith.constant 0 : index
    %c0_2 = arith.constant 0 : index
    %1 = vector.load %arg2[%c0_1, %c0_2] : memref<1x32xf32, #tpu.memory_space<vmem>>, vector<1x32xf32>
    %2 = vector.broadcast %1 : vector<1x32xf32> to vector<8x32xf32>
    %3 = arith.mulf %0, %2 : vector<8x32xf32>
    %c0_3 = arith.constant 0 : index
    %c0_4 = arith.constant 0 : index
    %4 = vector.load %arg3[%c0_3, %c0_4] : memref<1x32xf32, #tpu.memory_space<vmem>>, vector<1x32xf32>
    %5 = vector.broadcast %4 : vector<1x32xf32> to vector<8x32xf32>
    %6 = arith.addf %3, %5 : vector<8x32xf32>
    %c0_5 = arith.constant 0 : index
    %c0_6 = arith.constant 0 : index
    %7 = vector.load %arg4[%c0_5, %c0_6] : memref<8x32xf32, #tpu.memory_space<vmem>>, vector<8x32xf32>
    tpu.vector_store %arg4[%c0_5, %c0_6], %6 {strides = array<i32>} : memref<8x32xf32, #tpu.memory_space<vmem>>, vector<8x32xf32>,
    return
  }
  func.func @transform_0(%arg0: i32) -> (i32, i32) {
    %c0_i32 = arith.constant 0 : i32
    %c0_i32_0 = arith.constant 0 : i32
    return %arg0, %c0_i32 : i32, i32
  }
  func.func @transform_1(%arg0: i32) -> (i32, i32) {
    %c0_i32 = arith.constant 0 : i32
    %c0_i32_0 = arith.constant 0 : i32
    %c0_i32_1 = arith.constant 0 : i32
    return %c0_i32, %c0_i32_0 : i32, i32
  }
  func.func @transform_2(%arg0: i32) -> (i32, i32) {
    %c0_i32 = arith.constant 0 : i32
    %c0_i32_0 = arith.constant 0 : i32
    %c0_i32_1 = arith.constant 0 : i32
    return %c0_i32, %c0_i32_0 : i32, i32
  }
  func.func @transform_3(%arg0: i32) -> (i32, i32) {
    %c0_i32 = arith.constant 0 : i32
    %c0_i32_0 = arith.constant 0 : i32
    return %arg0, %c0_i32 : i32, i32
  }
}

</mosaic_0001>

<llo_original>
// kernel: tpu_custom_call.1
$region0: #{tpu_custom_call.1}
  #allocation0 [shape = 'u32[]', space=smem, size = 0x4, offset = 0x4, fixed_abs, tag = 'smem constant byte address 0x4 - core index']
  #allocation1 [shape = 'u32[72,128]{1,0:T(1,128)}', space=vmem, size = 0x9000, scoped, tag = 'internal scratch']
  %s0 = inlined_call_operand.hbm [shape: f32[8,32], index: 0, kind: input, shape index: {}]
  %s1 = inlined_call_operand.hbm [shape: f32[1,32], index: 1, kind: input, shape index: {}]
  %s2 = inlined_call_operand.vmem [shape: f32[1,32], index: 2, kind: input, shape index: {}]
  %s3 = inlined_call_operand.hbm [shape: f32[8,32], index: 3, kind: output, shape index: {}]
  %s4 = sld [smem:[#allocation0]]
  $region30: #{tpu_custom_call.1} parent=0
    _
  %s6 = ssub.s32 1, %s4
  %s7 = scalar_select 0, %s6, %s4
  $region1: #{tpu_custom_call.1} parent=0
    #allocation2 [shape = 'u8[4096]{0}', space=vmem, size = 0x1000, scoped, tag = 'input window, operand 0, single buffered']
    #allocation3 [shape = 's32[1]{0}', space=sflag, size = 0x4, scoped, tag = 'scoped memory for tpu_custom_call.1']
    #allocation4 [shape = 's32[1]{0}', space=sflag, size = 0x4, scoped, tag = 'scoped memory for tpu_custom_call.1']
    #allocation5 [shape = 'u8[512]{0}', space=vmem, size = 0x400, scoped, tag = 'input window, operand 1, single buffered']
    #allocation6 [shape = 's32[1]{0}', space=sflag, size = 0x4, scoped, tag = 'scoped memory for tpu_custom_call.1']
    #allocation7 [shape = 'u8[4096]{0}', space=vmem, size = 0x1000, scoped, tag = 'output window, operand 0, single buffered']
    %8 = vsyncpa [#allocation3], 0
    %9 = vsyncpa [#allocation6], 0
    %10 = vsyncpa [#allocation4], 0
    // Predicated region
    $region2: #{tpu_custom_call.1} parent=1 // pred_check
      _
    $region3: #{tpu_custom_call.1} parent=1 // pred_check_branch
      %12 = sbr.rel (0) target = $region5
    $region4: #{tpu_custom_call.1} parent=1 // pred_region
      %14 = vsyncadd [#allocation3], 0
      %s16 = sshll.u32 %s0, 4
      %s17 = int_to_ptr.hbm [resolvable:$true] %s16
      %s18 = sshll.u32 [#allocation2], 4
      %s19 = int_to_ptr.vmem [resolvable:$true] %s18
      %21 = dma.hbm_to_vmem [thread:$0]  %s17, 128, %s19, [#allocation3]
    $region5: #{tpu_custom_call.1} parent=1 // pred_fallthru
      _
    // Predicated region
    $region6: #{tpu_custom_call.1} parent=1 // pred_check
      _
    $region7: #{tpu_custom_call.1} parent=1 // pred_check_branch
      %23 = sbr.rel (0) target = $region9
    $region8: #{tpu_custom_call.1} parent=1 // pred_region
      %25 = vsyncadd [#allocation6], 0
      %s27 = sshll.u32 %s1, 4
      %s28 = int_to_ptr.hbm [resolvable:$true] %s27
      %s29 = sshll.u32 [#allocation5], 4
      %s30 = int_to_ptr.vmem [resolvable:$true] %s29
      %32 = dma.hbm_to_vmem [thread:$0]  %s28, 16, %s30, [#allocation6]
    $region9: #{tpu_custom_call.1} parent=1 // pred_fallthru
      _
    // Predicated region
    $region10: #{tpu_custom_call.1} parent=1 // pred_check
      _
    $region11: #{tpu_custom_call.1} parent=1 // pred_check_branch
      %34 = sbr.rel (0) target = $region13
    $region12: #{tpu_custom_call.1} parent=1 // pred_region
      _
    $region13: #{tpu_custom_call.1} parent=1 // pred_fallthru
      _
    // Predicated region
    $region14: #{tpu_custom_call.1} parent=1 // pred_check
      _
    $region15: #{tpu_custom_call.1} parent=1 // pred_check_branch
      %36 = sbr.rel (0) target = $region17
    $region16: #{tpu_custom_call.1} parent=1 // pred_region
      %38 = dma.done [#allocation3], 128
    $region17: #{tpu_custom_call.1} parent=1 // pred_fallthru
      _
    // Predicated region
    $region18: #{tpu_custom_call.1} parent=1 // pred_check
      _
    $region19: #{tpu_custom_call.1} parent=1 // pred_check_branch
      %40 = sbr.rel (0) target = $region21
    $region20: #{tpu_custom_call.1} parent=1 // pred_region
      %42 = dma.done [#allocation6], 16
    $region21: #{tpu_custom_call.1} parent=1 // pred_fallthru
      _
    %v43 = vld [vmem:[#allocation2] sm:$0xff]
    %v44 = vld [vmem:[#allocation5] sm:$0x1]
    %v46 = vperm.slane %v44, 0
    %v48 = vmul.f32 %v43, %v46
    %v49 = vld [vmem:[%s2] sm:$0x1]
    %v51 = vperm.slane %v49, 0
    %v53 = vadd.f32 %v48, %v51
    %vm54 = vcmask 261120
    %55 = vst.msk [vmem:[#allocation7] sm:$0xff] %vm54, %v53
    // Predicated region
    $region22: #{tpu_custom_call.1} parent=1 // pred_check
      _
    $region23: #{tpu_custom_call.1} parent=1 // pred_check_branch
      %57 = sbr.rel (0) target = $region25
    $region24: #{tpu_custom_call.1} parent=1 // pred_region
      %59 = vsyncadd [#allocation4], 0
      %s61 = sshll.u32 [#allocation7], 4
      %s62 = int_to_ptr.vmem [resolvable:$true] %s61
      %s63 = sshll.u32 %s3, 4
      %s64 = int_to_ptr.hbm [resolvable:$true] %s63
      %66 = dma.vmem_to_hbm [thread:$0]  %s62, 128, %s64, [#allocation4]
    $region25: #{tpu_custom_call.1} parent=1 // pred_fallthru
      _
    // Predicated region
    $region26: #{tpu_custom_call.1} parent=1 // pred_check
      _
    $region27: #{tpu_custom_call.1} parent=1 // pred_check_branch
      %68 = sbr.rel (0) target = $region29
    $region28: #{tpu_custom_call.1} parent=1 // pred_region
      %70 = dma.done [#allocation4], 128
    $region29: #{tpu_custom_call.1} parent=1 // pred_fallthru
      _
    %71 = vsyncpa [#allocation3], 1
    %72 = vsyncpa [#allocation6], 1
    %73 = vsyncpa [#allocation4], 1

</llo_original>
